<compile_context>
chip_gen: v7x
topology: tpu7x:2x2x1
jax: 0.10.0
libtpu: 0.0.40
codegen_flags: <defaults>
</compile_context>

<pallas_src>
import functools
import numpy as np
import jax
import jax.numpy as jnp
from jax.experimental import pallas as pl
from jax.experimental.pallas import tpu as pltpu


def _bn_local_kernel(x_ref, w_ref, b_ref, o_ref, *, eps):
    # x_ref: (1, n, C_BLK, L) — one virtual-batch group x one channel slab.
    x = x_ref[...].astype(jnp.float32)                        # matches torch .float()
    mean = jnp.mean(x, axis=(1, 3), keepdims=True)            # (1, 1, C_BLK, 1)
    d = x - mean                                              # hoisted once
    var = jnp.mean(d * d, axis=(1, 3), keepdims=True)         # unbiased=False (ddof=0)
    inv = jax.lax.rsqrt(var + eps)                            # EUP rsqrt
    w = w_ref[...][None, None, :, :]                          # (1, 1, C_BLK, 1)
    b = b_ref[...][None, None, :, :]
    # Fold normalize + affine into a single per-element mul/add.
    scale = w * inv                                           # per-channel
    shift = b - mean * scale                                  # per-channel
    o_ref[...] = x * scale + shift


def _choose_c_block(C, n, L, in_bytes, G, *, budget_bytes=24 << 20, min_grid=4):
    """Pick a channel-slab size C_BLK that keeps the pipelined VMEM footprint
    within budget and yields enough grid points to pipeline / feed megacore."""
    if C % 8 != 0 or C <= 8:
        return C  # full-C block is always a legal block shape
    cands = [c for c in range(8, C + 1, 8) if C % c == 0]
    # footprint ~= double-buffered (input block + f32 output block)
    def fp(c):
        return 2 * (n * c * L * in_bytes + n * c * L * 4)
    fitting = [c for c in cands if fp(c) <= budget_bytes] or [min(cands)]
    good = [c for c in fitting if G * (C // c) >= min_grid]
    return max(good) if good else max(fitting)


def batch_norm_local(x, weight, bias, *, virtual_bs=8, eps=1e-6, affine=True):
    """x: (B, C, L).  Returns float32 (B, C, L), matching the PyTorch module."""
    B, C, L = x.shape
    G = int(np.ceil(B / virtual_bs))
    assert B % G == 0, "B must be divisible by the number of virtual-batch groups"
    n = B // G

    x_g = x.reshape(G, n, C, L)
    if affine:
        w2 = weight.reshape(C, 1).astype(jnp.float32)
        b2 = bias.reshape(C, 1).astype(jnp.float32)
    else:
        w2 = jnp.ones((C, 1), jnp.float32)
        b2 = jnp.zeros((C, 1), jnp.float32)

    in_bytes = jnp.dtype(x.dtype).itemsize
    c_blk = _choose_c_block(C, n, L, in_bytes, G)
    num_c = C // c_blk

    kernel = functools.partial(_bn_local_kernel, eps=eps)

    out = pl.pallas_call(
        kernel,
        out_shape=jax.ShapeDtypeStruct((G, n, C, L), jnp.float32),
        grid_spec=pltpu.PrefetchScalarGridSpec(
            num_scalar_prefetch=0,
            grid=(G, num_c),
            in_specs=[
                pl.BlockSpec((1, n, c_blk, L), lambda g, c: (g, 0, c, 0)),
                pl.BlockSpec((c_blk, 1), lambda g, c: (c, 0)),
                pl.BlockSpec((c_blk, 1), lambda g, c: (c, 0)),
            ],
            out_specs=pl.BlockSpec((1, n, c_blk, L), lambda g, c: (g, 0, c, 0)),
        ),
        compiler_params=pltpu.CompilerParams(
            dimension_semantics=("parallel", "parallel"),
            vmem_limit_bytes=32 << 20,
        ),
    )(x_g, w2, b2)

    return out.reshape(B, C, L)


def _reference(x, weight, bias, *, virtual_bs=8, eps=1e-6):
    """Pure-JAX port of the PyTorch forward for verification."""
    B, C, L = x.shape
    x = x.astype(jnp.float32)
    G = int(np.ceil(B / virtual_bs))
    xg = x.reshape(G, -1, C, L)
    mean = jnp.mean(xg, axis=(1, 3), keepdims=True)
    var = jnp.var(xg, axis=(1, 3), keepdims=True)  # ddof=0 == unbiased=False
    xg = (xg - mean) / jnp.sqrt(var + eps)
    xg = xg * weight[None, :, None] + bias[None, :, None]
    return xg.reshape(B, C, L)


if __name__ == "__main__":
    key = jax.random.PRNGKey(0)
    B, C, L = 16, 16, 128
    virtual_bs = 8  # G = 2 groups of n = 8; channel axis splits into 2 slabs of 8

    x = jax.random.normal(key, (B, C, L), dtype=jnp.float32) * 2.0 + 0.5
    # Module __init__: weight = ones(C), bias = zeros(C). Use deterministic
    # non-trivial values so the affine path is actually exercised.
    weight = jnp.ones((C,), jnp.float32) + 0.05 * jnp.arange(C, dtype=jnp.float32)
    bias = 0.01 * jnp.arange(C, dtype=jnp.float32)

    out = batch_norm_local(x, weight, bias, virtual_bs=virtual_bs, eps=1e-6)
    out = jax.block_until_ready(out)

    ref = _reference(x, weight, bias, virtual_bs=virtual_bs, eps=1e-6)
    np.testing.assert_allclose(np.asarray(out), np.asarray(ref), rtol=1e-5, atol=1e-5)

    print("KERNEL_OK")
</pallas_src>

<mosaic_0001>
module attributes {stable_mosaic.version = 11 : i64} {
  func.func @_bn_local_kernel(%arg0: i32, %arg1: i32, %arg2: memref<1x8x8x128xf32, #tpu.memory_space<vmem>>, %arg3: memref<8x1xf32, #tpu.memory_space<vmem>>, %arg4: memref<8x1xf32, #tpu.memory_space<vmem>>, %arg5: memref<1x8x8x128xf32, #tpu.memory_space<vmem>>) attributes {dimension_semantics = [#tpu.dimension_semantics<parallel>, #tpu.dimension_semantics<parallel>], iteration_bounds = array<i64: 2, 2>, scalar_prefetch = 0 : i64, scratch_operands = 0 : i64, tpu.core_type = #tpu.core_type<tc>, window_params = [{transform_indices = @transform_0, window_bounds = array<i64: 1, 8, 8, 128>}, {transform_indices = @transform_1, window_bounds = array<i64: 8, 1>}, {transform_indices = @transform_2, window_bounds = array<i64: 8, 1>}, {transform_indices = @transform_3, window_bounds = array<i64: 1, 8, 8, 128>}]} {
    %c0 = arith.constant 0 : index
    %c0_0 = arith.constant 0 : index
    %c0_1 = arith.constant 0 : index
    %c0_2 = arith.constant 0 : index
    %0 = vector.load %arg2[%c0, %c0_0, %c0_1, %c0_2] : memref<1x8x8x128xf32, #tpu.memory_space<vmem>>, vector<1x8x8x128xf32>
    %cst = arith.constant dense<0.000000e+00> : vector<1x8xf32>
    %1 = vector.multi_reduction <add>, %0, %cst [1, 3] : vector<1x8x8x128xf32> to vector<1x8xf32>
    %2 = vector.shape_cast %1 : vector<1x8xf32> to vector<1x1x8x1xf32>
    %cst_3 = arith.constant 1.024000e+03 : f32
    %3 = vector.broadcast %cst_3 : f32 to vector<1x1x8x1xf32>
    %4 = arith.divf %2, %3 : vector<1x1x8x1xf32>
    %5 = vector.broadcast %4 : vector<1x1x8x1xf32> to vector<1x8x8x128xf32>
    %6 = arith.subf %0, %5 : vector<1x8x8x128xf32>
    %7 = arith.mulf %6, %6 : vector<1x8x8x128xf32>
    %cst_4 = arith.constant dense<0.000000e+00> : vector<1x8xf32>
    %8 = vector.multi_reduction <add>, %7, %cst_4 [1, 3] : vector<1x8x8x128xf32> to vector<1x8xf32>
    %9 = vector.shape_cast %8 : vector<1x8xf32> to vector<1x1x8x1xf32>
    %cst_5 = arith.constant 1.024000e+03 : f32
    %10 = vector.broadcast %cst_5 : f32 to vector<1x1x8x1xf32>
    %11 = arith.divf %9, %10 : vector<1x1x8x1xf32>
    %cst_6 = arith.constant 9.99999997E-7 : f32
    %12 = vector.broadcast %cst_6 : f32 to vector<1x1x8x1xf32>
    %13 = arith.addf %11, %12 : vector<1x1x8x1xf32>
    %14 = math.rsqrt %13 : vector<1x1x8x1xf32>
    %c0_7 = arith.constant 0 : index
    %c0_8 = arith.constant 0 : index
    %15 = vector.load %arg3[%c0_7, %c0_8] : memref<8x1xf32, #tpu.memory_space<vmem>>, vector<8x1xf32>
    %16 = vector.shape_cast %15 : vector<8x1xf32> to vector<1x1x8x1xf32>
    %c0_9 = arith.constant 0 : index
    %c0_10 = arith.constant 0 : index
    %17 = vector.load %arg4[%c0_9, %c0_10] : memref<8x1xf32, #tpu.memory_space<vmem>>, vector<8x1xf32>
    %18 = vector.shape_cast %17 : vector<8x1xf32> to vector<1x1x8x1xf32>
    %19 = arith.mulf %16, %14 : vector<1x1x8x1xf32>
    %20 = arith.mulf %4, %19 : vector<1x1x8x1xf32>
    %21 = arith.subf %18, %20 : vector<1x1x8x1xf32>
    %22 = vector.broadcast %19 : vector<1x1x8x1xf32> to vector<1x8x8x128xf32>
    %23 = arith.mulf %0, %22 : vector<1x8x8x128xf32>
    %24 = vector.broadcast %21 : vector<1x1x8x1xf32> to vector<1x8x8x128xf32>
    %25 = arith.addf %23, %24 : vector<1x8x8x128xf32>
    %c0_11 = arith.constant 0 : index
    %c0_12 = arith.constant 0 : index
    %c0_13 = arith.constant 0 : index
    %c0_14 = arith.constant 0 : index
    %26 = vector.load %arg5[%c0_11, %c0_12, %c0_13, %c0_14] : memref<1x8x8x128xf32, #tpu.memory_space<vmem>>, vector<1x8x8x128xf32>
    tpu.vector_store %arg5[%c0_11, %c0_12, %c0_13, %c0_14], %25 {strides = array<i32>} : memref<1x8x8x128xf32, #tpu.memory_space<vmem>>, vector<1x8x8x128xf32>,
    return
  }
  func.func @transform_0(%arg0: i32, %arg1: i32) -> (i32, i32, i32, i32) {
    %c0_i32 = arith.constant 0 : i32
    %c0_i32_0 = arith.constant 0 : i32
    %c0_i32_1 = arith.constant 0 : i32
    return %arg0, %c0_i32, %arg1, %c0_i32_0 : i32, i32, i32, i32
  }
  func.func @transform_1(%arg0: i32, %arg1: i32) -> (i32, i32) {
    %c0_i32 = arith.constant 0 : i32
    %c0_i32_0 = arith.constant 0 : i32
    return %arg1, %c0_i32 : i32, i32
  }
  func.func @transform_2(%arg0: i32, %arg1: i32) -> (i32, i32) {
    %c0_i32 = arith.constant 0 : i32
    %c0_i32_0 = arith.constant 0 : i32
    return %arg1, %c0_i32 : i32, i32
  }
  func.func @transform_3(%arg0: i32, %arg1: i32) -> (i32, i32, i32, i32) {
    %c0_i32 = arith.constant 0 : i32
    %c0_i32_0 = arith.constant 0 : i32
    %c0_i32_1 = arith.constant 0 : i32
    return %arg0, %c0_i32, %arg1, %c0_i32_0 : i32, i32, i32, i32
  }
}

</mosaic_0001>

<llo_original>
// kernel: tpu_custom_call.1
$region0: #{tpu_custom_call.1}
  #allocation0 [shape = 'u32[]', space=smem, size = 0x4, offset = 0x4, fixed_abs, tag = 'smem constant byte address 0x4 - core index']
  #allocation1 [shape = 'u32[144,128]{1,0:T(1,128)}', space=vmem, size = 0x12000, scoped, tag = 'internal scratch']
  %s0 = inlined_call_operand.hbm [shape: f32[2,8,16,128], index: 0, kind: input, shape index: {}]
  %s1 = inlined_call_operand.vmem [shape: f32[16,1], index: 1, kind: input, shape index: {}]
  %s2 = inlined_call_operand.vmem [shape: f32[16,1], index: 2, kind: input, shape index: {}]
  %s3 = inlined_call_operand.hbm [shape: f32[2,8,16,128], index: 3, kind: output, shape index: {}]
  %s4 = sld [smem:[#allocation0]]
  $region49: #{tpu_custom_call.1} parent=0
    _
  %s6 = ssub.s32 1, %s4
  %s7 = scalar_select 0, %s6, %s4
  $region1: #{tpu_custom_call.1} parent=0
    #allocation2 [shape = 'u8[65536]{0}', space=vmem, size = 0x10000, scoped, tag = 'input window, operand 0']
    #allocation3 [shape = 's32[2]{0}', space=sflag, size = 0x8, scoped, tag = 'scoped memory for tpu_custom_call.1']
    #allocation4 [shape = 's32[2]{0}', space=sflag, size = 0x8, scoped, tag = 'scoped memory for tpu_custom_call.1']
    #allocation5 [shape = 'u8[65536]{0}', space=vmem, size = 0x10000, scoped, tag = 'output window, operand 0']
    %8 = vsyncpa [#allocation3], 0
    %s9 = scalar_lea.sflag [#allocation3], 1
    %10 = vsyncpa %s9, 0
    %11 = vsyncpa [#allocation4], 0
    %s12 = scalar_lea.sflag [#allocation4], 1
    %13 = vsyncpa %s12, 0
    loop: start=0, step=1, limit=6
    $region2: #{tpu_custom_call.1} parent=1 // loop_pre_header
      _
    $region3: #{tpu_custom_call.1} parent=1 // loop_header
      %s15 = sphi 0, %s19
      %p16 = scmp.ge.s32.totalorder %s15, 6
      %s22 = sphi 0, %s34
      %s23 = sphi 0, %s30
      %s24 = sphi 0, %s22
      %s25 = sphi 0, %s23
      %s26 = sphi 0, %s24
      %s27 = sphi 0, %s25
      %s39 = sphi 0, %s41
      %s42 = sphi 0, %s39
      %s43 = sphi 0, %s42
      %s59 = sphi 0, %s43
      %s65 = sphi 0, %s67
      %s68 = sphi 0, %s65
      %s69 = sphi 0, %s68
      %s85 = sphi 0, %s69
      %s91 = sphi 0, %s93
      %s94 = sphi 0, %s91
      %s95 = sphi 0, %s94
      %s111 = sphi 0, %s95
      %s119 = sphi 0, %s121
      %s122 = sphi 0, %s119
      %s123 = sphi 0, %s122
      %s139 = sphi 0, %s123
    $region4: #{tpu_custom_call.1} parent=1 // loop_header_branch
      %18 = sbr.rel (%p16) target = $region8
    $region5: #{tpu_custom_call.1} parent=1 // loop_body
      %s20 = ssub.s32 %s15, 1
      %s21 = ssub.s32 %s15, 2
      %s28 = sadd.s32 1, %s23
      %p29 = scmp.ge.s32.totalorder %s28, 2
      %s30 = scalar_select %p29, 0, %s28
      %s31 = sadd.s32 1, %s22
      %s32 = scalar_select %p29, %s31, %s22
      %p33 = scmp.ge.s32.totalorder %s32, 2
      %s34 = scalar_select %p33, 0, %s32
      %s35 = ssub.s32 %s22, %s34
      %s36 = ssub.s32 %s23, %s30
      %s37 = sor.u32 %s35, %s36
      %p38 = scmp.eq.s32.totalorder %s37, 0
      %s40 = sadd.s32 %s39, 1
      %s41 = scalar_select %p38, %s39, %s40
      %p44 = pneg %p38
      %p45 = scmp.eq.s32.totalorder %s15, 3
      %p46 = por %p44, %p45
      %p47 = scmp.ne.s32.totalorder %s39, %s42
      %p48 = scmp.eq.s32.totalorder %s15, 0
      %p49 = por %p47, %p48
      %p50 = scmp.ne.s32.totalorder %s39, %s42
      %p51 = scmp.eq.s32.totalorder %s20, 3
      %p52 = por %p50, %p51
      %p53 = scmp.ne.s32.totalorder %s42, %s43
      %p54 = scmp.eq.s32.totalorder %s20, 0
      %p55 = por %p53, %p54
      %p56 = scmp.ne.s32.totalorder %s42, %s43
      %p57 = scmp.eq.s32.totalorder %s21, 3
      %p58 = por %p56, %p57
      %p60 = scmp.ne.s32.totalorder %s43, %s59
      %p61 = scmp.eq.s32.totalorder %s21, 0
      %p62 = por %p60, %p61
      %s63 = ssub.s32 %s23, %s30
      %p64 = scmp.eq.s32.totalorder %s63, 0
      %s66 = sadd.s32 %s65, 1
      %s67 = scalar_select %p64, %s65, %s66
      %p70 = pneg %p64
      %p71 = scmp.eq.s32.totalorder %s15, 3
      %p72 = por %p70, %p71
      %p73 = scmp.ne.s32.totalorder %s65, %s68
      %p74 = scmp.eq.s32.totalorder %s15, 0
      %p75 = por %p73, %p74
      %p76 = scmp.ne.s32.totalorder %s65, %s68
      %p77 = scmp.eq.s32.totalorder %s20, 3
      %p78 = por %p76, %p77
      %p79 = scmp.ne.s32.totalorder %s68, %s69
      %p80 = scmp.eq.s32.totalorder %s20, 0
      %p81 = por %p79, %p80
      %p82 = scmp.ne.s32.totalorder %s68, %s69
      %p83 = scmp.eq.s32.totalorder %s21, 3
      %p84 = por %p82, %p83
      %p86 = scmp.ne.s32.totalorder %s69, %s85
      %p87 = scmp.eq.s32.totalorder %s21, 0
      %p88 = por %p86, %p87
      %s89 = ssub.s32 %s23, %s30
      %p90 = scmp.eq.s32.totalorder %s89, 0
      %s92 = sadd.s32 %s91, 1
      %s93 = scalar_select %p90, %s91, %s92
      %p96 = pneg %p90
      %p97 = scmp.eq.s32.totalorder %s15, 3
      %p98 = por %p96, %p97
      %p99 = scmp.ne.s32.totalorder %s91, %s94
      %p100 = scmp.eq.s32.totalorder %s15, 0
      %p101 = por %p99, %p100
      %p102 = scmp.ne.s32.totalorder %s91, %s94
      %p103 = scmp.eq.s32.totalorder %s20, 3
      %p104 = por %p102, %p103
      %p105 = scmp.ne.s32.totalorder %s94, %s95
      %p106 = scmp.eq.s32.totalorder %s20, 0
      %p107 = por %p105, %p106
      %p108 = scmp.ne.s32.totalorder %s94, %s95
      %p109 = scmp.eq.s32.totalorder %s21, 3
      %p110 = por %p108, %p109
      %p112 = scmp.ne.s32.totalorder %s95, %s111
      %p113 = scmp.eq.s32.totalorder %s21, 0
      %p114 = por %p112, %p113
      %s115 = ssub.s32 %s22, %s34
      %s116 = ssub.s32 %s23, %s30
      %s117 = sor.u32 %s115, %s116
      %p118 = scmp.eq.s32.totalorder %s117, 0
      %s120 = sadd.s32 %s119, 1
      %s121 = scalar_select %p118, %s119, %s120
      %p124 = pneg %p118
      %p125 = scmp.eq.s32.totalorder %s15, 3
      %p126 = por %p124, %p125
      %p127 = scmp.ne.s32.totalorder %s119, %s122
      %p128 = scmp.eq.s32.totalorder %s15, 0
      %p129 = por %p127, %p128
      %p130 = scmp.ne.s32.totalorder %s119, %s122
      %p131 = scmp.eq.s32.totalorder %s20, 3
      %p132 = por %p130, %p131
      %p133 = scmp.ne.s32.totalorder %s122, %s123
      %p134 = scmp.eq.s32.totalorder %s20, 0
      %p135 = por %p133, %p134
      %p136 = scmp.ne.s32.totalorder %s122, %s123
      %p137 = scmp.eq.s32.totalorder %s21, 3
      %p138 = por %p136, %p137
      %p140 = scmp.ne.s32.totalorder %s123, %s139
      %p141 = scmp.eq.s32.totalorder %s21, 0
      %p142 = por %p140, %p141
      %p143 = scmp.le.s32.totalorder 1, %s15
      %p144 = scmp.lt.s32.totalorder %s15, 5
      %p145 = pnand %p143, %p144
      %p146 = pneg %p145
      // Predicated region
      $region9: #{tpu_custom_call.1} parent=5 // pred_check
        _
      $region10: #{tpu_custom_call.1} parent=5 // pred_check_branch
        %148 = sbr.rel (%p145) target = $region12
      $region11: #{tpu_custom_call.1} parent=5 // pred_region
        %s149 = ssub.s32 %s15, 1
      $region12: #{tpu_custom_call.1} parent=5 // pred_fallthru
        _
      %p150 = scmp.lt.s32.totalorder %s15, 4
      // Predicated region
      $region13: #{tpu_custom_call.1} parent=5 // pred_check
        %p151 = pneg %p150
      $region14: #{tpu_custom_call.1} parent=5 // pred_check_branch
        %153 = sbr.rel (%p151) target = $region16
      $region15: #{tpu_custom_call.1} parent=5 // pred_region
        // Predicated region
        $region17: #{tpu_custom_call.1} parent=15 // pred_check
          %p154 = pneg %p49
        $region18: #{tpu_custom_call.1} parent=15 // pred_check_branch
          %156 = sbr.rel (%p154) target = $region20
        $region19: #{tpu_custom_call.1} parent=15 // pred_region
          %s157 = sand.u32 %s39, 1
          %s158 = scalar_lea.sflag [#allocation3], %s157
          %s159 = sand.u32 %s39, 1
          %s160 = smul.addr %s159, 64
          %s161 = scalar_lea.vmem [#allocation2], %s160
          %s163 = ssub.s32 1024, 1024
          %164 = vsyncadd %s158, %s163
          %s165 = smul.addr %s22, 16
          %s166 = sadd.s32 %s23, %s165
          %s167 = smul.addr %s166, 128
          %s168 = scalar_lea.hbm %s0, %s167
          %s169 = sshll.u32 %s161, 4
          %s170 = int_to_ptr.vmem [resolvable:$true] %s169
          %175 = dma.hbm_to_vmem [thread:$0]  %s168, 1024, %s170, %s158, 256, 128, 8
        $region20: #{tpu_custom_call.1} parent=15 // pred_fallthru
          _
        // Predicated region
        $region21: #{tpu_custom_call.1} parent=15 // pred_check
          %p176 = pneg %p75
        $region22: #{tpu_custom_call.1} parent=15 // pred_check_branch
          %178 = sbr.rel (%p176) target = $region24
        $region23: #{tpu_custom_call.1} parent=15 // pred_region
          %p179 = scmp.lt.s32.totalorder %s23, 1
          %s180 = scalar_select %p179, %s23, 1
          %s181 = smul.addr %s180, 8
          %s182 = scalar_lea.vmem %s1, %s181
        $region24: #{tpu_custom_call.1} parent=15 // pred_fallthru
          _
        // Predicated region
        $region25: #{tpu_custom_call.1} parent=15 // pred_check
          %p183 = pneg %p101
        $region26: #{tpu_custom_call.1} parent=15 // pred_check_branch
          %185 = sbr.rel (%p183) target = $region28
        $region27: #{tpu_custom_call.1} parent=15 // pred_region
          %p186 = scmp.lt.s32.totalorder %s23, 1
          %s187 = scalar_select %p186, %s23, 1
          %s188 = smul.addr %s187, 8
          %s189 = scalar_lea.vmem %s2, %s188
        $region28: #{tpu_custom_call.1} parent=15 // pred_fallthru
          _
      $region16: #{tpu_custom_call.1} parent=5 // pred_fallthru
        _
      %p190 = scmp.le.s32.totalorder 1, %s15
      %p191 = scmp.lt.s32.totalorder %s15, 5
      %p192 = pnand %p190, %p191
      %p193 = pneg %p192
      // Predicated region
      $region29: #{tpu_custom_call.1} parent=5 // pred_check
        _
      $region30: #{tpu_custom_call.1} parent=5 // pred_check_branch
        %195 = sbr.rel (%p192) target = $region32
      $region31: #{tpu_custom_call.1} parent=5 // pred_region
        %s196 = ssub.s32 %s15, 1
        %s197 = sand.u32 %s42, 1
        %s198 = scalar_lea.sflag [#allocation3], %s197
        %s199 = sand.u32 %s42, 1
        %s200 = smul.addr %s199, 64
        %s201 = scalar_lea.vmem [#allocation2], %s200
        // Predicated region
        $region33: #{tpu_custom_call.1} parent=31 // pred_check
          %p202 = pneg %p55
        $region34: #{tpu_custom_call.1} parent=31 // pred_check_branch
          %204 = sbr.rel (%p202) target = $region36
        $region35: #{tpu_custom_call.1} parent=31 // pred_region
          %205 = dma.done %s198, 1024
        $region36: #{tpu_custom_call.1} parent=31 // pred_fallthru
          _
        %s206 = sand.u32 %s42, 1
        %s207 = scalar_lea.sflag [#allocation3], %s206
        %s208 = sand.u32 %s42, 1
        %s209 = smul.addr %s208, 64
        %s210 = scalar_lea.vmem [#allocation2], %s209
        %p211 = pneg %p55
        %p212 = pneg %p52
        %p213 = scmp.lt.s32.totalorder %s25, 1
        %s214 = scalar_select %p213, %s25, 1
        %s215 = smul.addr %s214, 8
        %s216 = scalar_lea.vmem %s1, %s215
        %p217 = pneg %p81
        %p218 = pneg %p78
        %p219 = scmp.lt.s32.totalorder %s25, 1
        %s220 = scalar_select %p219, %s25, 1
        %s221 = smul.addr %s220, 8
        %s222 = scalar_lea.vmem %s2, %s221
        %p223 = pneg %p107
        %p224 = pneg %p104
        %p225 = pneg %p135
        %p226 = pneg %p132
        %s227 = sand.u32 %s122, 1
        %s228 = scalar_lea.sflag [#allocation4], %s227
        %s229 = sand.u32 %s122, 1
        %s230 = smul.addr %s229, 64
        %s231 = scalar_lea.vmem [#allocation5], %s230
        %p232 = scmp.lt.s32.totalorder %s25, 1
        %s233 = scalar_select %p232, %s25, 1
        %s234 = smul.addr %s233, 8
        %s235 = scalar_lea.vmem %s1, %s234
        %p236 = scmp.lt.s32.totalorder %s25, 1
        %s237 = scalar_select %p236, %s25, 1
        %s238 = smul.addr %s237, 8
        %s239 = scalar_lea.vmem %s2, %s238
        %v240 = vld [vmem:[%s201] sm:$0xff]
        %v241 = vld [vmem:[%s201 + $0x8] sm:$0xff]
        %v242 = vld [vmem:[%s201 + $0x10] sm:$0xff]
        %v243 = vld [vmem:[%s201 + $0x18] sm:$0xff]
        %v244 = vld [vmem:[%s201 + $0x20] sm:$0xff]
        %v245 = vld [vmem:[%s201 + $0x28] sm:$0xff]
        %v246 = vld [vmem:[%s201 + $0x30] sm:$0xff]
        %v247 = vld [vmem:[%s201 + $0x38] sm:$0xff]
        %v248 = vadd.f32 %v240, %v241
        %v249 = vadd.f32 %v248, %v242
        %v250 = vadd.f32 %v249, %v243
        %v251 = vadd.f32 %v250, %v244
        %v252 = vadd.f32 %v251, %v245
        %v253 = vadd.f32 %v252, %v246
        %v254 = vadd.f32 %v253, %v247
        %255 = vadd.xlane.f32.xlu0 %v254
        %v256 = vpop.xlane.xlu0 %255
        %v257 = vrcp.pop 1024.0
        %v258 = vmul.f32 %v256, %v257
        %v259 = vsub.f32 %v240, %v258
        %v260 = vsub.f32 %v241, %v258
        %v261 = vsub.f32 %v242, %v258
        %v262 = vsub.f32 %v243, %v258
        %v263 = vsub.f32 %v244, %v258
        %v264 = vsub.f32 %v245, %v258
        %v265 = vsub.f32 %v246, %v258
        %v266 = vsub.f32 %v247, %v258
        %v267 = vmul.f32 %v259, %v259
        %v268 = vmul.f32 %v260, %v260
        %v269 = vmul.f32 %v261, %v261
        %v270 = vmul.f32 %v262, %v262
        %v271 = vmul.f32 %v263, %v263
        %v272 = vmul.f32 %v264, %v264
        %v273 = vmul.f32 %v265, %v265
        %v274 = vmul.f32 %v266, %v266
        %v275 = vadd.f32 %v267, %v268
        %v276 = vadd.f32 %v275, %v269
        %v277 = vadd.f32 %v276, %v270
        %v278 = vadd.f32 %v277, %v271
        %v279 = vadd.f32 %v278, %v272
        %v280 = vadd.f32 %v279, %v273
        %v281 = vadd.f32 %v280, %v274
        %282 = vadd.xlane.f32.xlu0 %v281
        %v283 = vpop.xlane.xlu0 %282
        %v284 = vmul.f32 %v283, %v257
        %v285 = vadd.f32 %v284, 1e-06
        %v286 = vrsqrt.pop %v285
        %v287 = vld [vmem:[%s235] sm:$0xff]
        %v288 = vld [vmem:[%s239] sm:$0xff]
        %v289 = vmul.f32 %v287, %v286
        %v290 = vmul.f32 %v258, %v289
        %v291 = vsub.f32 %v288, %v290
        %293 = vset.pattern.permute.xlu0 0
        %294 = vperm.xlu0 %293, %v289
        %v295 = vpop.permute.xlu0 %294
        %v297 = vmul.f32 %v240, %v295
        %v298 = vmul.f32 %v241, %v295
        %v299 = vmul.f32 %v242, %v295
        %v300 = vmul.f32 %v243, %v295
        %v301 = vmul.f32 %v244, %v295
        %v302 = vmul.f32 %v245, %v295
        %v303 = vmul.f32 %v246, %v295
        %v304 = vmul.f32 %v247, %v295
        %306 = vset.pattern.permute.xlu0 0
        %307 = vperm.xlu0 %306, %v291
        %v308 = vpop.permute.xlu0 %307
        %v310 = vadd.f32 %v297, %v308
        %v311 = vadd.f32 %v298, %v308
        %v312 = vadd.f32 %v299, %v308
        %v313 = vadd.f32 %v300, %v308
        %v314 = vadd.f32 %v301, %v308
        %v315 = vadd.f32 %v302, %v308
        %v316 = vadd.f32 %v303, %v308
        %v317 = vadd.f32 %v304, %v308
        %318 = vst [vmem:[%s231] sm:$0xff] %v310
        %319 = vst [vmem:[%s231 + $0x8] sm:$0xff] %v311
        %320 = vst [vmem:[%s231 + $0x10] sm:$0xff] %v312
        %321 = vst [vmem:[%s231 + $0x18] sm:$0xff] %v313
        %322 = vst [vmem:[%s231 + $0x20] sm:$0xff] %v314
        %323 = vst [vmem:[%s231 + $0x28] sm:$0xff] %v315
        %324 = vst [vmem:[%s231 + $0x30] sm:$0xff] %v316
        %325 = vst [vmem:[%s231 + $0x38] sm:$0xff] %v317
        %s326 = sand.u32 %s122, 1
        %s327 = scalar_lea.sflag [#allocation4], %s326
        %s328 = sand.u32 %s122, 1
        %s329 = smul.addr %s328, 64
        %s330 = scalar_lea.vmem [#allocation5], %s329
        // Predicated region
        $region37: #{tpu_custom_call.1} parent=31 // pred_check
          %p331 = pneg %p132
        $region38: #{tpu_custom_call.1} parent=31 // pred_check_branch
          %333 = sbr.rel (%p331) target = $region40
        $region39: #{tpu_custom_call.1} parent=31 // pred_region
          %s335 = ssub.s32 1024, 1024
          %336 = vsyncadd %s327, %s335
          %s337 = smul.addr %s24, 16
          %s338 = sadd.s32 %s25, %s337
          %s339 = smul.addr %s338, 128
          %s340 = scalar_lea.hbm %s3, %s339
          %s341 = sshll.u32 %s330, 4
          %s342 = int_to_ptr.vmem [resolvable:$true] %s341
          %347 = dma.vmem_to_hbm [thread:$0]  %s342, 1024, %s340, %s327, 128, 256, 8
        $region40: #{tpu_custom_call.1} parent=31 // pred_fallthru
          _
      $region32: #{tpu_custom_call.1} parent=5 // pred_fallthru
        _
      %p348 = scmp.le.s32.totalorder 2, %s15
      // Predicated region
      $region41: #{tpu_custom_call.1} parent=5 // pred_check
        %p349 = pneg %p348
      $region42: #{tpu_custom_call.1} parent=5 // pred_check_branch
        %351 = sbr.rel (%p349) target = $region44
      $region43: #{tpu_custom_call.1} parent=5 // pred_region
        %s352 = ssub.s32 %s15, 2
        // Predicated region
        $region45: #{tpu_custom_call.1} parent=43 // pred_check
          %p353 = pneg %p138
        $region46: #{tpu_custom_call.1} parent=43 // pred_check_branch
          %355 = sbr.rel (%p353) target = $region48
        $region47: #{tpu_custom_call.1} parent=43 // pred_region
          %s356 = sand.u32 %s123, 1
          %s357 = scalar_lea.sflag [#allocation4], %s356
          %s358 = sand.u32 %s123, 1
          %s359 = smul.addr %s358, 64
          %s360 = scalar_lea.vmem [#allocation5], %s359
          %361 = dma.done %s357, 1024
        $region48: #{tpu_custom_call.1} parent=43 // pred_fallthru
          _
      $region44: #{tpu_custom_call.1} parent=5 // pred_fallthru
        _
    $region6: #{tpu_custom_call.1} parent=1 // loop_footer
      %s19 = sadd.s32 1, %s15
    $region7: #{tpu_custom_call.1} parent=1 // loop_footer_branch
      %14 = sbr.rel target = $region3
    $region8: #{tpu_custom_call.1} parent=1 // loop_exit
      _
    %362 = vsyncpa [#allocation3], 1
    %s363 = scalar_lea.sflag [#allocation3], 1
    %364 = vsyncpa %s363, 1
    %365 = vsyncpa [#allocation4], 1
    %s366 = scalar_lea.sflag [#allocation4], 1
    %367 = vsyncpa %s366, 1

</llo_original>
